<compile_context>
chip_gen: v6e
topology: v6e:2x2x1
jax: 0.10.0
libtpu: 0.0.40
codegen_flags: <defaults>
</compile_context>

<pallas_src>
import functools

import jax
import jax.numpy as jnp
from jax.experimental import pallas as pl
from jax.experimental.pallas import tpu as pltpu


HIDDEN = 64
D_IN = 28 * 28
D_OUT = 10


def _round_up(a, b):
    return ((a + b - 1) // b) * b


def mlp_kernel(x_ref, w1_ref, w2_ref, w3_ref, w4_ref, o_ref):
    # x arrives f32 from HBM; cast to bf16 in VMEM (no separate wrapper pass).
    xb = x_ref[...].astype(jnp.bfloat16)
    h = jnp.dot(xb, w1_ref[...], preferred_element_type=jnp.float32)
    h = jnp.maximum(h, 0.0).astype(jnp.bfloat16)
    h = jnp.dot(h, w2_ref[...], preferred_element_type=jnp.float32)
    h = jnp.maximum(h, 0.0).astype(jnp.bfloat16)
    h = jnp.dot(h, w3_ref[...], preferred_element_type=jnp.float32)
    h = jnp.maximum(h, 0.0).astype(jnp.bfloat16)
    out = jnp.dot(h, w4_ref[...], preferred_element_type=jnp.float32)
    o_ref[...] = out.astype(o_ref.dtype)


@functools.partial(jax.jit, static_argnames=("tile_b",))
def mlp_forward(x, w1, w2, w3, w4, *, tile_b=2048):
    """x: (B, 1, 28, 28) or (B, 784). Returns (B, 10) float32 logits."""
    B = x.shape[0]
    x2 = x.reshape(B, -1)
    assert x2.shape[1] == D_IN
    x2 = x2.astype(jnp.float32)  # keep f32 in HBM; bf16 cast happens in-kernel

    # Weights bf16 at rest (these casts are no-ops under jit when already bf16).
    w1c = w1.astype(jnp.bfloat16)
    w2c = w2.astype(jnp.bfloat16)
    w3c = w3.astype(jnp.bfloat16)
    w4c = w4.astype(jnp.bfloat16)

    # Batch tile: large for big batches, shrunk for small ones, and capped at ~B/2
    # (8-aligned for f32 sublanes) so the grid has >= 2 steps whenever B > 8, letting
    # v7x shard the parallel batch axis across its two TensorCores.
    half = _round_up(max((B + 1) // 2, 8), 8)
    tile_b_eff = max(8, min(tile_b, half))
    grid = (pl.cdiv(B, tile_b_eff),)  # no explicit batch pad; partial last block is fine
                                      # (rows are independent, OOB output rows are dropped)

    weight_bytes = (D_IN * HIDDEN + 2 * HIDDEN * HIDDEN + HIDDEN * D_OUT) * 2
    # VMEM budget: double-buffered f32 x block + double-buffered (lane-padded) out block
    # + double-buffered weights + in-kernel temporaries, with headroom.
    vmem_need = (
        2 * tile_b_eff * D_IN * 4
        + 2 * tile_b_eff * 128 * 4
        + 2 * weight_bytes
        + tile_b_eff * (2 * D_IN + 12 * HIDDEN)
    )
    vmem_limit = int(min(max(vmem_need + (4 << 20), 16 << 20), 56 << 20))

    flops = 2 * B * (D_IN * HIDDEN + HIDDEN * HIDDEN + HIDDEN * HIDDEN + HIDDEN * D_OUT)
    bytes_accessed = B * D_IN * 4 + weight_bytes + B * D_OUT * 4

    out = pl.pallas_call(
        mlp_kernel,
        out_shape=jax.ShapeDtypeStruct((B, D_OUT), jnp.float32),
        grid_spec=pltpu.PrefetchScalarGridSpec(
            num_scalar_prefetch=0,
            grid=grid,
            in_specs=[
                pl.BlockSpec((tile_b_eff, D_IN), lambda i: (i, 0)),   # x tile (streamed, f32)
                pl.BlockSpec((D_IN, HIDDEN), lambda i: (0, 0)),       # w1 (resident, bf16)
                pl.BlockSpec((HIDDEN, HIDDEN), lambda i: (0, 0)),     # w2
                pl.BlockSpec((HIDDEN, HIDDEN), lambda i: (0, 0)),     # w3
                pl.BlockSpec((HIDDEN, D_OUT), lambda i: (0, 0)),      # w4 (narrow, bf16)
            ],
            out_specs=pl.BlockSpec((tile_b_eff, D_OUT), lambda i: (i, 0)),
        ),
        compiler_params=pltpu.CompilerParams(
            dimension_semantics=("parallel",),
            vmem_limit_bytes=vmem_limit,
        ),
        cost_estimate=pl.CostEstimate(
            flops=int(flops), transcendentals=0, bytes_accessed=int(bytes_accessed)
        ),
    )(x2, w1c, w2c, w3c, w4c)

    return out


def init_params(key):
    """Deterministic init matching the PyTorch layer shapes (stored as (in, out))."""
    k1, k2, k3, k4 = jax.random.split(key, 4)
    w1 = jax.random.uniform(k1, (D_IN, HIDDEN), jnp.float32, -1.0, 1.0) / jnp.sqrt(784.0)
    w2 = jax.random.uniform(k2, (HIDDEN, HIDDEN), jnp.float32, -1.0, 1.0) / jnp.sqrt(64.0)
    w3 = jax.random.uniform(k3, (HIDDEN, HIDDEN), jnp.float32, -1.0, 1.0) / jnp.sqrt(64.0)
    w4 = jax.random.uniform(k4, (HIDDEN, D_OUT), jnp.float32, -1.0, 1.0) / jnp.sqrt(64.0)
    return w1, w2, w3, w4


def reference_forward(x, w1, w2, w3, w4):
    """Pure-JAX reference mirroring the kernel's bf16-operand / f32-accumulate numerics."""
    cdt = jnp.bfloat16
    h = x.reshape(x.shape[0], -1).astype(cdt)
    for w in (w1, w2, w3):
        h = jnp.dot(h, w.astype(cdt), preferred_element_type=jnp.float32)
        h = jnp.maximum(h, 0.0).astype(cdt)
    return jnp.dot(h, w4.astype(cdt), preferred_element_type=jnp.float32)


# TODO(synk): training utilities (Adam/SGD/RMSprop, cross-entropy loss, data loaders) from
# the PyTorch module have no kernel equivalent; only the forward pass is implemented.

if __name__ == "__main__":
    key = jax.random.PRNGKey(0)
    kx, kw = jax.random.split(key)
    # MNIST-like input: (batch, 1, 28, 28) -> flattened to (batch, 784) inside the wrapper.
    x = jax.random.normal(kx, (16, 1, 28, 28), dtype=jnp.float32)
    w1, w2, w3, w4 = init_params(kw)
    # Hoisted one-time cast: weights live in bf16 at rest.
    w1, w2, w3, w4 = (w.astype(jnp.bfloat16) for w in (w1, w2, w3, w4))

    out = mlp_forward(x, w1, w2, w3, w4)
    out = jax.block_until_ready(out)

    ref = reference_forward(x, w1, w2, w3, w4)
    assert out.shape == (16, 10)
    assert jnp.allclose(out, ref, atol=1e-2, rtol=1e-2), float(jnp.max(jnp.abs(out - ref)))
    print("KERNEL_OK")
</pallas_src>

<mosaic_0001>
module attributes {stable_mosaic.version = 11 : i64} {
  func.func @mlp_kernel(%arg0: i32, %arg1: memref<8x784xf32, #tpu.memory_space<vmem>>, %arg2: memref<784x64xbf16, #tpu.memory_space<vmem>>, %arg3: memref<64x64xbf16, #tpu.memory_space<vmem>>, %arg4: memref<64x64xbf16, #tpu.memory_space<vmem>>, %arg5: memref<64x10xbf16, #tpu.memory_space<vmem>>, %arg6: memref<8x10xf32, #tpu.memory_space<vmem>>) attributes {dimension_semantics = [#tpu.dimension_semantics<parallel>], iteration_bounds = array<i64: 2>, scalar_prefetch = 0 : i64, scratch_operands = 0 : i64, tpu.core_type = #tpu.core_type<tc>, window_params = [{transform_indices = @transform_0, window_bounds = array<i64: 8, 784>}, {pipeline_mode = #tpu.pipeline_mode<synchronous>, transform_indices = @transform_1, window_bounds = array<i64: 784, 64>}, {pipeline_mode = #tpu.pipeline_mode<synchronous>, transform_indices = @transform_2, window_bounds = array<i64: 64, 64>}, {pipeline_mode = #tpu.pipeline_mode<synchronous>, transform_indices = @transform_3, window_bounds = array<i64: 64, 64>}, {pipeline_mode = #tpu.pipeline_mode<synchronous>, transform_indices = @transform_4, window_bounds = array<i64: 64, 10>}, {transform_indices = @transform_5, window_bounds = array<i64: 8, 10>}]} {
    %c0 = arith.constant 0 : index
    %c0_0 = arith.constant 0 : index
    %0 = vector.load %arg1[%c0, %c0_0] : memref<8x784xf32, #tpu.memory_space<vmem>>, vector<8x784xf32>
    %1 = arith.truncf %0 : vector<8x784xf32> to vector<8x784xbf16>
    %c0_1 = arith.constant 0 : index
    %c0_2 = arith.constant 0 : index
    %2 = vector.load %arg2[%c0_1, %c0_2] : memref<784x64xbf16, #tpu.memory_space<vmem>>, vector<784x64xbf16>
    %cst = arith.constant dense<0.000000e+00> : vector<8x64xf32>
    %3 = tpu.matmul %1, %2, %cst {dimension_numbers = #tpu.dot_dimension_numbers<[1], [0], [0], [1], [0, 0, 1, 1], [], []>} : vector<8x784xbf16>, vector<784x64xbf16>, vector<8x64xf32> -> vector<8x64xf32>
    %cst_3 = arith.constant 0.000000e+00 : f32
    %4 = vector.broadcast %cst_3 : f32 to vector<8x64xf32>
    %5 = arith.maximumf %3, %4 : vector<8x64xf32>
    %6 = arith.truncf %5 : vector<8x64xf32> to vector<8x64xbf16>
    %c0_4 = arith.constant 0 : index
    %c0_5 = arith.constant 0 : index
    %7 = vector.load %arg3[%c0_4, %c0_5] : memref<64x64xbf16, #tpu.memory_space<vmem>>, vector<64x64xbf16>
    %cst_6 = arith.constant dense<0.000000e+00> : vector<8x64xf32>
    %8 = tpu.matmul %6, %7, %cst_6 {dimension_numbers = #tpu.dot_dimension_numbers<[1], [0], [0], [1], [0, 0, 1, 1], [], []>} : vector<8x64xbf16>, vector<64x64xbf16>, vector<8x64xf32> -> vector<8x64xf32>
    %cst_7 = arith.constant 0.000000e+00 : f32
    %9 = vector.broadcast %cst_7 : f32 to vector<8x64xf32>
    %10 = arith.maximumf %8, %9 : vector<8x64xf32>
    %11 = arith.truncf %10 : vector<8x64xf32> to vector<8x64xbf16>
    %c0_8 = arith.constant 0 : index
    %c0_9 = arith.constant 0 : index
    %12 = vector.load %arg4[%c0_8, %c0_9] : memref<64x64xbf16, #tpu.memory_space<vmem>>, vector<64x64xbf16>
    %cst_10 = arith.constant dense<0.000000e+00> : vector<8x64xf32>
    %13 = tpu.matmul %11, %12, %cst_10 {dimension_numbers = #tpu.dot_dimension_numbers<[1], [0], [0], [1], [0, 0, 1, 1], [], []>} : vector<8x64xbf16>, vector<64x64xbf16>, vector<8x64xf32> -> vector<8x64xf32>
    %cst_11 = arith.constant 0.000000e+00 : f32
    %14 = vector.broadcast %cst_11 : f32 to vector<8x64xf32>
    %15 = arith.maximumf %13, %14 : vector<8x64xf32>
    %16 = arith.truncf %15 : vector<8x64xf32> to vector<8x64xbf16>
    %c0_12 = arith.constant 0 : index
    %c0_13 = arith.constant 0 : index
    %17 = vector.load %arg5[%c0_12, %c0_13] : memref<64x10xbf16, #tpu.memory_space<vmem>>, vector<64x10xbf16>
    %cst_14 = arith.constant dense<0.000000e+00> : vector<8x10xf32>
    %18 = tpu.matmul %16, %17, %cst_14 {dimension_numbers = #tpu.dot_dimension_numbers<[1], [0], [0], [1], [0, 0, 1, 1], [], []>} : vector<8x64xbf16>, vector<64x10xbf16>, vector<8x10xf32> -> vector<8x10xf32>
    %c0_15 = arith.constant 0 : index
    %c0_16 = arith.constant 0 : index
    %19 = vector.load %arg6[%c0_15, %c0_16] : memref<8x10xf32, #tpu.memory_space<vmem>>, vector<8x10xf32>
    tpu.vector_store %arg6[%c0_15, %c0_16], %18 {strides = array<i32>} : memref<8x10xf32, #tpu.memory_space<vmem>>, vector<8x10xf32>,
    return
  }
  func.func @transform_0(%arg0: i32) -> (i32, i32) {
    %c0_i32 = arith.constant 0 : i32
    %c0_i32_0 = arith.constant 0 : i32
    return %arg0, %c0_i32 : i32, i32
  }
  func.func @transform_1(%arg0: i32) -> (i32, i32) {
    %c0_i32 = arith.constant 0 : i32
    %c0_i32_0 = arith.constant 0 : i32
    %c0_i32_1 = arith.constant 0 : i32
    return %c0_i32, %c0_i32_0 : i32, i32
  }
  func.func @transform_2(%arg0: i32) -> (i32, i32) {
    %c0_i32 = arith.constant 0 : i32
    %c0_i32_0 = arith.constant 0 : i32
    %c0_i32_1 = arith.constant 0 : i32
    return %c0_i32, %c0_i32_0 : i32, i32
  }
  func.func @transform_3(%arg0: i32) -> (i32, i32) {
    %c0_i32 = arith.constant 0 : i32
    %c0_i32_0 = arith.constant 0 : i32
    %c0_i32_1 = arith.constant 0 : i32
    return %c0_i32, %c0_i32_0 : i32, i32
  }
  func.func @transform_4(%arg0: i32) -> (i32, i32) {
    %c0_i32 = arith.constant 0 : i32
    %c0_i32_0 = arith.constant 0 : i32
    %c0_i32_1 = arith.constant 0 : i32
    return %c0_i32, %c0_i32_0 : i32, i32
  }
  func.func @transform_5(%arg0: i32) -> (i32, i32) {
    %c0_i32 = arith.constant 0 : i32
    %c0_i32_0 = arith.constant 0 : i32
    return %arg0, %c0_i32 : i32, i32
  }
}

</mosaic_0001>

<llo_original>
// kernel: mlp_forward.1
$region0: #{mlp_forward.1}
  #allocation0 [shape = 'u32[]', space=smem, size = 0x4, offset = 0x4, fixed_abs, tag = 'smem constant byte address 0x4 - core index']
  #allocation1 [shape = 'u32[144,128]{1,0:T(1,128)}', space=vmem, size = 0x12000, scoped, tag = 'internal scratch']
  %s0 = inlined_call_operand.vmem [shape: f32[16,784], index: 0, kind: input, shape index: {}]
  %s1 = inlined_call_operand.vmem [shape: bf16[784,64], index: 1, kind: input, shape index: {}]
  %s2 = inlined_call_operand.vmem [shape: bf16[64,64], index: 2, kind: input, shape index: {}]
  %s3 = inlined_call_operand.vmem [shape: bf16[64,64], index: 3, kind: input, shape index: {}]
  %s4 = inlined_call_operand.vmem [shape: bf16[64,10], index: 4, kind: input, shape index: {}]
  %s5 = inlined_call_operand.hbm [shape: f32[16,10], index: 5, kind: output, shape index: {}]
  %s6 = sld [smem:[#allocation0]]
  $region53: #{mlp_forward.1} parent=0
    _
  %s8 = ssub.s32 1, %s6
  %s9 = scalar_select 0, %s8, %s6
  $region1: #{mlp_forward.1} parent=0
    #allocation2 [shape = 'u8[8192]{0}', space=vmem, size = 0x2000, scoped, tag = 'output window, operand 0']
    #allocation3 [shape = 's32[2]{0}', space=sflag, size = 0x8, scoped, tag = 'scoped memory for mlp_forward.1']
    %10 = vsyncpa [#allocation3], 0
    %s11 = scalar_lea.sflag [#allocation3], 1
    %12 = vsyncpa %s11, 0
    loop: start=0, step=1, limit=4
    $region2: #{mlp_forward.1} parent=1 // loop_pre_header
      _
    $region3: #{mlp_forward.1} parent=1 // loop_header
      %s14 = sphi 0, %s18
      %p15 = scmp.ge.s32.totalorder %s14, 4
      %s24 = sphi 0, %s26
      %s27 = sphi 0, %s24
      %s28 = sphi 0, %s27
      %s44 = sphi 0, %s28
      %s48 = sphi 0, %s48
      %s50 = sphi 0, %s48
      %s51 = sphi 0, %s50
      %s65 = sphi 0, %s51
      %s69 = sphi 0, %s69
      %s71 = sphi 0, %s69
      %s72 = sphi 0, %s71
      %s86 = sphi 0, %s72
      %s90 = sphi 0, %s90
      %s92 = sphi 0, %s90
      %s93 = sphi 0, %s92
      %s107 = sphi 0, %s93
      %s111 = sphi 0, %s111
      %s113 = sphi 0, %s111
      %s114 = sphi 0, %s113
      %s128 = sphi 0, %s114
      %s134 = sphi 0, %s136
      %s137 = sphi 0, %s134
      %s138 = sphi 0, %s137
      %s154 = sphi 0, %s138
    $region4: #{mlp_forward.1} parent=1 // loop_header_branch
      %17 = sbr.rel (%p15) target = $region8
    $region5: #{mlp_forward.1} parent=1 // loop_body
      %s19 = ssub.s32 %s14, 1
      %s20 = ssub.s32 %s14, 2
      %s21 = sadd.s32 %s14, 1
      %s22 = ssub.s32 %s14, %s21
      %p23 = scmp.eq.s32.totalorder %s22, 0
      %s25 = sadd.s32 %s24, 1
      %s26 = scalar_select %p23, %s24, %s25
      %p29 = pneg %p23
      %p30 = scmp.eq.s32.totalorder %s14, 1
      %p31 = por %p29, %p30
      %p32 = scmp.ne.s32.totalorder %s24, %s27
      %p33 = scmp.eq.s32.totalorder %s14, 0
      %p34 = por %p32, %p33
      %p35 = scmp.ne.s32.totalorder %s24, %s27
      %p36 = scmp.eq.s32.totalorder %s19, 1
      %p37 = por %p35, %p36
      %p38 = scmp.ne.s32.totalorder %s27, %s28
      %p39 = scmp.eq.s32.totalorder %s19, 0
      %p40 = por %p38, %p39
      %p41 = scmp.ne.s32.totalorder %s27, %s28
      %p42 = scmp.eq.s32.totalorder %s20, 1
      %p43 = por %p41, %p42
      %p45 = scmp.ne.s32.totalorder %s28, %s44
      %p46 = scmp.eq.s32.totalorder %s20, 0
      %p47 = por %p45, %p46
      %s49 = sadd.s32 %s48, 1
      %p52 = scmp.eq.s32.totalorder %s14, 1
      %p53 = scmp.ne.s32.totalorder %s48, %s50
      %p54 = scmp.eq.s32.totalorder %s14, 0
      %p55 = por %p53, %p54
      %p56 = scmp.ne.s32.totalorder %s48, %s50
      %p57 = scmp.eq.s32.totalorder %s19, 1
      %p58 = por %p56, %p57
      %p59 = scmp.ne.s32.totalorder %s50, %s51
      %p60 = scmp.eq.s32.totalorder %s19, 0
      %p61 = por %p59, %p60
      %p62 = scmp.ne.s32.totalorder %s50, %s51
      %p63 = scmp.eq.s32.totalorder %s20, 1
      %p64 = por %p62, %p63
      %p66 = scmp.ne.s32.totalorder %s51, %s65
      %p67 = scmp.eq.s32.totalorder %s20, 0
      %p68 = por %p66, %p67
      %s70 = sadd.s32 %s69, 1
      %p73 = scmp.eq.s32.totalorder %s14, 1
      %p74 = scmp.ne.s32.totalorder %s69, %s71
      %p75 = scmp.eq.s32.totalorder %s14, 0
      %p76 = por %p74, %p75
      %p77 = scmp.ne.s32.totalorder %s69, %s71
      %p78 = scmp.eq.s32.totalorder %s19, 1
      %p79 = por %p77, %p78
      %p80 = scmp.ne.s32.totalorder %s71, %s72
      %p81 = scmp.eq.s32.totalorder %s19, 0
      %p82 = por %p80, %p81
      %p83 = scmp.ne.s32.totalorder %s71, %s72
      %p84 = scmp.eq.s32.totalorder %s20, 1
      %p85 = por %p83, %p84
      %p87 = scmp.ne.s32.totalorder %s72, %s86
      %p88 = scmp.eq.s32.totalorder %s20, 0
      %p89 = por %p87, %p88
      %s91 = sadd.s32 %s90, 1
      %p94 = scmp.eq.s32.totalorder %s14, 1
      %p95 = scmp.ne.s32.totalorder %s90, %s92
      %p96 = scmp.eq.s32.totalorder %s14, 0
      %p97 = por %p95, %p96
      %p98 = scmp.ne.s32.totalorder %s90, %s92
      %p99 = scmp.eq.s32.totalorder %s19, 1
      %p100 = por %p98, %p99
      %p101 = scmp.ne.s32.totalorder %s92, %s93
      %p102 = scmp.eq.s32.totalorder %s19, 0
      %p103 = por %p101, %p102
      %p104 = scmp.ne.s32.totalorder %s92, %s93
      %p105 = scmp.eq.s32.totalorder %s20, 1
      %p106 = por %p104, %p105
      %p108 = scmp.ne.s32.totalorder %s93, %s107
      %p109 = scmp.eq.s32.totalorder %s20, 0
      %p110 = por %p108, %p109
      %s112 = sadd.s32 %s111, 1
      %p115 = scmp.eq.s32.totalorder %s14, 1
      %p116 = scmp.ne.s32.totalorder %s111, %s113
      %p117 = scmp.eq.s32.totalorder %s14, 0
      %p118 = por %p116, %p117
      %p119 = scmp.ne.s32.totalorder %s111, %s113
      %p120 = scmp.eq.s32.totalorder %s19, 1
      %p121 = por %p119, %p120
      %p122 = scmp.ne.s32.totalorder %s113, %s114
      %p123 = scmp.eq.s32.totalorder %s19, 0
      %p124 = por %p122, %p123
      %p125 = scmp.ne.s32.totalorder %s113, %s114
      %p126 = scmp.eq.s32.totalorder %s20, 1
      %p127 = por %p125, %p126
      %p129 = scmp.ne.s32.totalorder %s114, %s128
      %p130 = scmp.eq.s32.totalorder %s20, 0
      %p131 = por %p129, %p130
      %s132 = ssub.s32 %s14, %s21
      %p133 = scmp.eq.s32.totalorder %s132, 0
      %s135 = sadd.s32 %s134, 1
      %s136 = scalar_select %p133, %s134, %s135
      %p139 = pneg %p133
      %p140 = scmp.eq.s32.totalorder %s14, 1
      %p141 = por %p139, %p140
      %p142 = scmp.ne.s32.totalorder %s134, %s137
      %p143 = scmp.eq.s32.totalorder %s14, 0
      %p144 = por %p142, %p143
      %p145 = scmp.ne.s32.totalorder %s134, %s137
      %p146 = scmp.eq.s32.totalorder %s19, 1
      %p147 = por %p145, %p146
      %p148 = scmp.ne.s32.totalorder %s137, %s138
      %p149 = scmp.eq.s32.totalorder %s19, 0
      %p150 = por %p148, %p149
      %p151 = scmp.ne.s32.totalorder %s137, %s138
      %p152 = scmp.eq.s32.totalorder %s20, 1
      %p153 = por %p151, %p152
      %p155 = scmp.ne.s32.totalorder %s138, %s154
      %p156 = scmp.eq.s32.totalorder %s20, 0
      %p157 = por %p155, %p156
      %p158 = scmp.le.s32.totalorder 1, %s14
      %p159 = scmp.lt.s32.totalorder %s14, 3
      %p160 = pnand %p158, %p159
      %p161 = pneg %p160
      // Predicated region
      $region9: #{mlp_forward.1} parent=5 // pred_check
        _
      $region10: #{mlp_forward.1} parent=5 // pred_check_branch
        %163 = sbr.rel (%p160) target = $region12
      $region11: #{mlp_forward.1} parent=5 // pred_region
        %s164 = ssub.s32 %s14, 1
        // Predicated region
        $region13: #{mlp_forward.1} parent=11 // pred_check
          %p165 = pneg %p61
        $region14: #{mlp_forward.1} parent=11 // pred_check_branch
          %167 = sbr.rel (%p165) target = $region16
        $region15: #{mlp_forward.1} parent=11 // pred_region
          _
        $region16: #{mlp_forward.1} parent=11 // pred_fallthru
          _
        // Predicated region
        $region17: #{mlp_forward.1} parent=11 // pred_check
          %p168 = pneg %p82
        $region18: #{mlp_forward.1} parent=11 // pred_check_branch
          %170 = sbr.rel (%p168) target = $region20
        $region19: #{mlp_forward.1} parent=11 // pred_region
          _
        $region20: #{mlp_forward.1} parent=11 // pred_fallthru
          _
        // Predicated region
        $region21: #{mlp_forward.1} parent=11 // pred_check
          %p171 = pneg %p103
        $region22: #{mlp_forward.1} parent=11 // pred_check_branch
          %173 = sbr.rel (%p171) target = $region24
        $region23: #{mlp_forward.1} parent=11 // pred_region
          _
        $region24: #{mlp_forward.1} parent=11 // pred_fallthru
          _
        // Predicated region
        $region25: #{mlp_forward.1} parent=11 // pred_check
          %p174 = pneg %p124
        $region26: #{mlp_forward.1} parent=11 // pred_check_branch
          %176 = sbr.rel (%p174) target = $region28
        $region27: #{mlp_forward.1} parent=11 // pred_region
          _
        $region28: #{mlp_forward.1} parent=11 // pred_fallthru
          _
      $region12: #{mlp_forward.1} parent=5 // pred_fallthru
        _
      %p177 = scmp.lt.s32.totalorder %s14, 2
      // Predicated region
      $region29: #{mlp_forward.1} parent=5 // pred_check
        %p178 = pneg %p177
      $region30: #{mlp_forward.1} parent=5 // pred_check_branch
        %180 = sbr.rel (%p178) target = $region32
      $region31: #{mlp_forward.1} parent=5 // pred_region
        // Predicated region
        $region33: #{mlp_forward.1} parent=31 // pred_check
          %p181 = pneg %p34
        $region34: #{mlp_forward.1} parent=31 // pred_check_branch
          %183 = sbr.rel (%p181) target = $region36
        $region35: #{mlp_forward.1} parent=31 // pred_region
          %p184 = scmp.lt.s32.totalorder %s14, 1
          %s185 = scalar_select %p184, %s14, 1
          %s186 = smul.addr %s185, 7
          %s187 = smul.addr %s186, 8
          %s188 = scalar_lea.vmem %s0, %s187
        $region36: #{mlp_forward.1} parent=31 // pred_fallthru
          _
      $region32: #{mlp_forward.1} parent=5 // pred_fallthru
        _
      %p189 = scmp.le.s32.totalorder 1, %s14
      %p190 = scmp.lt.s32.totalorder %s14, 3
      %p191 = pnand %p189, %p190
      %p192 = pneg %p191
      // Predicated region
      $region37: #{mlp_forward.1} parent=5 // pred_check
        _
      $region38: #{mlp_forward.1} parent=5 // pred_check_branch
        %194 = sbr.rel (%p191) target = $region40
      $region39: #{mlp_forward.1} parent=5 // pred_region
        %s195 = ssub.s32 %s14, 1
        %p196 = scmp.lt.s32.totalorder %s19, 1
        %s197 = scalar_select %p196, %s19, 1
        %s198 = smul.addr %s197, 7
        %s199 = smul.addr %s198, 8
        %s200 = scalar_lea.vmem %s0, %s199
        %p201 = pneg %p40
        %p202 = pneg %p37
        %p203 = pneg %p61
        %p204 = pneg %p58
        %p205 = pneg %p82
        %p206 = pneg %p79
        %p207 = pneg %p103
        %p208 = pneg %p100
        %p209 = pneg %p124
        %p210 = pneg %p121
        %p211 = pneg %p150
        %p212 = pneg %p147
        %s213 = sand.u32 %s137, 1
        %s214 = scalar_lea.sflag [#allocation3], %s213
        %s215 = sand.u32 %s137, 1
        %s216 = smul.addr %s215, 8
        %s217 = scalar_lea.vmem [#allocation2], %s216
        %p218 = scmp.lt.s32.totalorder %s19, 1
        %s219 = scalar_select %p218, %s19, 1
        %s220 = smul.addr %s219, 7
        %s221 = smul.addr %s220, 8
        %s222 = scalar_lea.vmem %s0, %s221
        %v224 = vld [vmem:[%s222] sm:$0xff]
        %v225 = vld [vmem:[%s222 + $0x8] sm:$0xff]
        %v226 = vld [vmem:[%s222 + $0x10] sm:$0xff]
        %v227 = vld [vmem:[%s222 + $0x18] sm:$0xff]
        %v228 = vld [vmem:[%s222 + $0x20] sm:$0xff]
        %v229 = vld [vmem:[%s222 + $0x28] sm:$0xff]
        %v230 = vld [vmem:[%s222 + $0x30] sm:$0xff]
        %v231 = vpack.c.bf16 %v224, %v224
        %v232 = vpack.c.bf16 %v225, %v225
        %v233 = vpack.c.bf16 %v226, %v226
        %v234 = vpack.c.bf16 %v227, %v227
        %v235 = vpack.c.bf16 %v228, %v228
        %v236 = vpack.c.bf16 %v229, %v229
        %v237 = vpack.c.bf16 %v230, %v230
        %v238 = vld [vmem:[%s1] sm:$0xf]
        %v239 = vld [vmem:[%s1 + $0x4] sm:$0xf]
        %v240 = vld [vmem:[%s1 + $0x8] sm:$0xf]
        %v241 = vld [vmem:[%s1 + $0xc] sm:$0xf]
        %v242 = vld [vmem:[%s1 + $0x10] sm:$0xf]
        %v243 = vld [vmem:[%s1 + $0x14] sm:$0xf]
        %v244 = vld [vmem:[%s1 + $0x18] sm:$0xf]
        %v245 = vld [vmem:[%s1 + $0x1c] sm:$0xf]
        %v246 = vld [vmem:[%s1 + $0x20] sm:$0xf]
        %v247 = vld [vmem:[%s1 + $0x24] sm:$0xf]
        %v248 = vld [vmem:[%s1 + $0x28] sm:$0xf]
        %v249 = vld [vmem:[%s1 + $0x2c] sm:$0xf]
        %v250 = vld [vmem:[%s1 + $0x30] sm:$0xf]
        %v251 = vld [vmem:[%s1 + $0x34] sm:$0xf]
        %v252 = vld [vmem:[%s1 + $0x38] sm:$0xf]
        %v253 = vld [vmem:[%s1 + $0x3c] sm:$0xf]
        %v254 = vld [vmem:[%s1 + $0x40] sm:$0xf]
        %v255 = vld [vmem:[%s1 + $0x44] sm:$0xf]
        %v256 = vld [vmem:[%s1 + $0x48] sm:$0xf]
        %v257 = vld [vmem:[%s1 + $0x4c] sm:$0xf]
        %v258 = vld [vmem:[%s1 + $0x50] sm:$0xf]
        %v259 = vld [vmem:[%s1 + $0x54] sm:$0xf]
        %v260 = vld [vmem:[%s1 + $0x58] sm:$0xf]
        %v261 = vld [vmem:[%s1 + $0x5c] sm:$0xf]
        %v262 = vld [vmem:[%s1 + $0x60] sm:$0xf]
        %v263 = vld [vmem:[%s1 + $0x64] sm:$0xf]
        %v264 = vld [vmem:[%s1 + $0x68] sm:$0xf]
        %v265 = vld [vmem:[%s1 + $0x6c] sm:$0xf]
        %v266 = vld [vmem:[%s1 + $0x70] sm:$0xf]
        %v267 = vld [vmem:[%s1 + $0x74] sm:$0xf]
        %v268 = vld [vmem:[%s1 + $0x78] sm:$0xf]
        %v269 = vld [vmem:[%s1 + $0x7c] sm:$0xf]
        %v270 = vld [vmem:[%s1 + $0x80] sm:$0xf]
        %v271 = vld [vmem:[%s1 + $0x84] sm:$0xf]
        %v272 = vld [vmem:[%s1 + $0x88] sm:$0xf]
        %v273 = vld [vmem:[%s1 + $0x8c] sm:$0xf]
        %v274 = vld [vmem:[%s1 + $0x90] sm:$0xf]
        %v275 = vld [vmem:[%s1 + $0x94] sm:$0xf]
        %v276 = vld [vmem:[%s1 + $0x98] sm:$0xf]
        %v277 = vld [vmem:[%s1 + $0x9c] sm:$0xf]
        %v278 = vld [vmem:[%s1 + $0xa0] sm:$0xf]
        %v279 = vld [vmem:[%s1 + $0xa4] sm:$0xf]
        %v280 = vld [vmem:[%s1 + $0xa8] sm:$0xf]
        %v281 = vld [vmem:[%s1 + $0xac] sm:$0xf]
        %v282 = vld [vmem:[%s1 + $0xb0] sm:$0xf]
        %v283 = vld [vmem:[%s1 + $0xb4] sm:$0xf]
        %v284 = vld [vmem:[%s1 + $0xb8] sm:$0xf]
        %v285 = vld [vmem:[%s1 + $0xbc] sm:$0xf]
        %v286 = vld [vmem:[%s1 + $0xc0] sm:$0xf]
        %v287 = vld [vmem:[%s1 + $0xc4] sm:$0xf]
        %v288 = vld [vmem:[%s1 + $0xc8] sm:$0xf]
        %v289 = vld [vmem:[%s1 + $0xcc] sm:$0xf]
        %v290 = vld [vmem:[%s1 + $0xd0] sm:$0xf]
        %v291 = vld [vmem:[%s1 + $0xd4] sm:$0xf]
        %v292 = vld [vmem:[%s1 + $0xd8] sm:$0xf]
        %v293 = vld [vmem:[%s1 + $0xdc] sm:$0xf]
        %v294 = vld [vmem:[%s1 + $0xe0] sm:$0xf]
        %v295 = vld [vmem:[%s1 + $0xe4] sm:$0xf]
        %v296 = vld [vmem:[%s1 + $0xe8] sm:$0xf]
        %v297 = vld [vmem:[%s1 + $0xec] sm:$0xf]
        %v298 = vld [vmem:[%s1 + $0xf0] sm:$0xf]
        %v299 = vld [vmem:[%s1 + $0xf4] sm:$0xf]
        %v300 = vld [vmem:[%s1 + $0xf8] sm:$0xf]
        %v301 = vld [vmem:[%s1 + $0xfc] sm:$0xf]
        %v302 = vld [vmem:[%s1 + $0x100] sm:$0xf]
        %v303 = vld [vmem:[%s1 + $0x104] sm:$0xf]
        %v304 = vld [vmem:[%s1 + $0x108] sm:$0xf]
        %v305 = vld [vmem:[%s1 + $0x10c] sm:$0xf]
        %v306 = vld [vmem:[%s1 + $0x110] sm:$0xf]
        %v307 = vld [vmem:[%s1 + $0x114] sm:$0xf]
        %v308 = vld [vmem:[%s1 + $0x118] sm:$0xf]
        %v309 = vld [vmem:[%s1 + $0x11c] sm:$0xf]
        %v310 = vld [vmem:[%s1 + $0x120] sm:$0xf]
        %v311 = vld [vmem:[%s1 + $0x124] sm:$0xf]
        %v312 = vld [vmem:[%s1 + $0x128] sm:$0xf]
        %v313 = vld [vmem:[%s1 + $0x12c] sm:$0xf]
        %v314 = vld [vmem:[%s1 + $0x130] sm:$0xf]
        %v315 = vld [vmem:[%s1 + $0x134] sm:$0xf]
        %v316 = vld [vmem:[%s1 + $0x138] sm:$0xf]
        %v317 = vld [vmem:[%s1 + $0x13c] sm:$0xf]
        %v318 = vld [vmem:[%s1 + $0x140] sm:$0xf]
        %v319 = vld [vmem:[%s1 + $0x144] sm:$0xf]
        %v320 = vld [vmem:[%s1 + $0x148] sm:$0xf]
        %v321 = vld [vmem:[%s1 + $0x14c] sm:$0xf]
        %v322 = vld [vmem:[%s1 + $0x150] sm:$0xf]
        %v323 = vld [vmem:[%s1 + $0x154] sm:$0xf]
        %v324 = vld [vmem:[%s1 + $0x158] sm:$0xf]
        %v325 = vld [vmem:[%s1 + $0x15c] sm:$0xf]
        %v326 = vld [vmem:[%s1 + $0x160] sm:$0xf]
        %v327 = vld [vmem:[%s1 + $0x164] sm:$0xf]
        %v328 = vld [vmem:[%s1 + $0x168] sm:$0xf]
        %v329 = vld [vmem:[%s1 + $0x16c] sm:$0xf]
        %v330 = vld [vmem:[%s1 + $0x170] sm:$0xf]
        %v331 = vld [vmem:[%s1 + $0x174] sm:$0xf]
        %v332 = vld [vmem:[%s1 + $0x178] sm:$0xf]
        %v333 = vld [vmem:[%s1 + $0x17c] sm:$0xf]
        %v334 = vld [vmem:[%s1 + $0x180] sm:$0xf]
        %v335 = vld [vmem:[%s1 + $0x184] sm:$0xf]
        %v434 = vunpack.c.l.b16 %v238
        %v435 = vunpack.c.l.b16 %v239
        %v436 = vunpack.c.l.b16 %v240
        %v437 = vunpack.c.l.b16 %v241
        %v438 = vunpack.c.l.b16 %v242
        %v439 = vunpack.c.l.b16 %v243
        %v440 = vunpack.c.l.b16 %v244
        %v441 = vunpack.c.l.b16 %v245
        %v442 = vunpack.c.l.b16 %v246
        %v443 = vunpack.c.l.b16 %v247
        %v444 = vunpack.c.l.b16 %v248
        %v445 = vunpack.c.l.b16 %v249
        %v446 = vunpack.c.l.b16 %v250
        %v447 = vunpack.c.l.b16 %v251
        %v448 = vunpack.c.l.b16 %v252
        %v449 = vunpack.c.l.b16 %v253
        %v450 = vunpack.c.l.b16 %v254
        %v451 = vunpack.c.l.b16 %v255
        %v452 = vunpack.c.l.b16 %v256
        %v453 = vunpack.c.l.b16 %v257
        %v454 = vunpack.c.l.b16 %v258
        %v455 = vunpack.c.l.b16 %v259
        %v456 = vunpack.c.l.b16 %v260
        %v457 = vunpack.c.l.b16 %v261
        %v458 = vunpack.c.l.b16 %v262
        %v459 = vunpack.c.l.b16 %v263
        %v460 = vunpack.c.l.b16 %v264
        %v461 = vunpack.c.l.b16 %v265
        %v462 = vunpack.c.l.b16 %v266
        %v463 = vunpack.c.l.b16 %v267
        %v464 = vunpack.c.l.b16 %v268
        %v465 = vunpack.c.l.b16 %v269
        %v466 = vunpack.c.l.b16 %v270
        %v467 = vunpack.c.l.b16 %v271
        %v468 = vunpack.c.l.b16 %v272
        %v469 = vunpack.c.l.b16 %v273
        %v470 = vunpack.c.l.b16 %v274
        %v471 = vunpack.c.l.b16 %v275
        %v472 = vunpack.c.l.b16 %v276
        %v473 = vunpack.c.l.b16 %v277
        %v474 = vunpack.c.l.b16 %v278
        %v475 = vunpack.c.l.b16 %v279
        %v476 = vunpack.c.l.b16 %v280
        %v477 = vunpack.c.l.b16 %v281
        %v478 = vunpack.c.l.b16 %v282
        %v479 = vunpack.c.l.b16 %v283
        %v480 = vunpack.c.l.b16 %v284
        %v481 = vunpack.c.l.b16 %v285
        %v482 = vunpack.c.l.b16 %v286
        %v483 = vunpack.c.l.b16 %v287
        %v484 = vunpack.c.l.b16 %v288
        %v485 = vunpack.c.l.b16 %v289
        %v486 = vunpack.c.l.b16 %v290
        %v487 = vunpack.c.l.b16 %v291
        %v488 = vunpack.c.l.b16 %v292
        %v489 = vunpack.c.l.b16 %v293
        %v490 = vunpack.c.l.b16 %v294
        %v491 = vunpack.c.l.b16 %v295
        %v492 = vunpack.c.l.b16 %v296
        %v493 = vunpack.c.l.b16 %v297
        %v494 = vunpack.c.l.b16 %v298
        %v495 = vunpack.c.l.b16 %v299
        %v496 = vunpack.c.l.b16 %v300
        %v497 = vunpack.c.l.b16 %v301
        %v498 = vunpack.c.l.b16 %v302
        %v499 = vunpack.c.l.b16 %v303
        %v500 = vunpack.c.l.b16 %v304
        %v501 = vunpack.c.l.b16 %v305
        %v502 = vunpack.c.l.b16 %v306
        %v503 = vunpack.c.l.b16 %v307
        %v504 = vunpack.c.l.b16 %v308
        %v505 = vunpack.c.l.b16 %v309
        %v506 = vunpack.c.l.b16 %v310
        %v507 = vunpack.c.l.b16 %v311
        %v508 = vunpack.c.l.b16 %v312
        %v509 = vunpack.c.l.b16 %v313
        %v510 = vunpack.c.l.b16 %v314
        %v511 = vunpack.c.l.b16 %v315
        %v512 = vunpack.c.l.b16 %v316
        %v513 = vunpack.c.l.b16 %v317
        %v514 = vunpack.c.l.b16 %v318
        %v515 = vunpack.c.l.b16 %v319
        %v516 = vunpack.c.l.b16 %v320
        %v517 = vunpack.c.l.b16 %v321
        %v518 = vunpack.c.l.b16 %v322
        %v519 = vunpack.c.l.b16 %v323
        %v520 = vunpack.c.l.b16 %v324
        %v521 = vunpack.c.l.b16 %v325
        %v522 = vunpack.c.l.b16 %v326
        %v523 = vunpack.c.l.b16 %v327
        %v524 = vunpack.c.l.b16 %v328
        %v525 = vunpack.c.l.b16 %v329
        %v526 = vunpack.c.l.b16 %v330
        %v527 = vunpack.c.l.b16 %v331
        %v528 = vunpack.c.l.b16 %v332
        %v529 = vunpack.c.l.b16 %v333
        %v530 = vunpack.c.l.b16 %v334
        %v531 = vunpack.c.l.b16 %v335
        %v532 = vpack.c.b16 %v435, %v434
        %v533 = vpack.c.b16 %v437, %v436
        %v534 = vpack.c.b16 %v439, %v438
        %v535 = vpack.c.b16 %v441, %v440
        %v536 = vpack.c.b16 %v443, %v442
        %v537 = vpack.c.b16 %v445, %v444
        %v538 = vpack.c.b16 %v447, %v446
        %v539 = vpack.c.b16 %v449, %v448
        %v540 = vpack.c.b16 %v451, %v450
        %v541 = vpack.c.b16 %v453, %v452
        %v542 = vpack.c.b16 %v455, %v454
        %v543 = vpack.c.b16 %v457, %v456
        %v544 = vpack.c.b16 %v459, %v458
        %v545 = vpack.c.b16 %v461, %v460
        %v546 = vpack.c.b16 %v463, %v462
        %v547 = vpack.c.b16 %v465, %v464
        %v548 = vpack.c.b16 %v467, %v466
        %v549 = vpack.c.b16 %v469, %v468
        %v550 = vpack.c.b16 %v471, %v470
        %v551 = vpack.c.b16 %v473, %v472
        %v552 = vpack.c.b16 %v475, %v474
        %v553 = vpack.c.b16 %v477, %v476
        %v554 = vpack.c.b16 %v479, %v478
        %v555 = vpack.c.b16 %v481, %v480
        %v556 = vpack.c.b16 %v483, %v482
        %v557 = vpack.c.b16 %v485, %v484
        %v558 = vpack.c.b16 %v487, %v486
        %v559 = vpack.c.b16 %v489, %v488
        %v560 = vpack.c.b16 %v491, %v490
        %v561 = vpack.c.b16 %v493, %v492
        %v562 = vpack.c.b16 %v495, %v494
        %v563 = vpack.c.b16 %v497, %v496
        %v564 = vpack.c.b16 %v499, %v498
        %v565 = vpack.c.b16 %v501, %v500
        %v566 = vpack.c.b16 %v503, %v502
        %v567 = vpack.c.b16 %v505, %v504
        %v568 = vpack.c.b16 %v507, %v506
        %v569 = vpack.c.b16 %v509, %v508
        %v570 = vpack.c.b16 %v511, %v510
        %v571 = vpack.c.b16 %v513, %v512
        %v572 = vpack.c.b16 %v515, %v514
        %v573 = vpack.c.b16 %v517, %v516
        %v574 = vpack.c.b16 %v519, %v518
        %v575 = vpack.c.b16 %v521, %v520
        %v576 = vpack.c.b16 %v523, %v522
        %v577 = vpack.c.b16 %v525, %v524
        %v578 = vpack.c.b16 %v527, %v526
        %v579 = vpack.c.b16 %v529, %v528
        %v580 = vpack.c.b16 %v531, %v530
        %vm630 = vcmask 130048
        %v632 = vsel %vm630, %v237, 0
        %634 = vmatprep.subr.bf16.mxu0 0
        %635 = vmatpush1.bf16.msra.mxu0 %v539
        %636 = vmatprep.subr.bf16.mxu0 0
        %637 = vmatpush1.bf16.msra.mxu0 %v538
        %638 = vmatprep.subr.bf16.mxu0 0
        %639 = vmatpush1.bf16.msra.mxu0 %v537
        %640 = vmatprep.subr.bf16.mxu0 0
        %641 = vmatpush1.bf16.msra.mxu0 %v536
        %642 = vmatprep.subr.bf16.mxu0 0
        %643 = vmatpush1.bf16.msra.mxu0 %v535
        %644 = vmatprep.subr.bf16.mxu0 0
        %645 = vmatpush1.bf16.msra.mxu0 %v534
        %646 = vmatprep.subr.bf16.mxu0 0
        %647 = vmatpush1.bf16.msra.mxu0 %v533
        %648 = vmatprep.subr.bf16.mxu0 0
        %649 = vmatpush1.bf16.msra.mxu0 %v532
        %650 = vmatprep.subr.bf16.mxu0 0
        %651 = vmatpush2.bf16.msra.mxu0 %v547
        %652 = vmatprep.subr.bf16.mxu0 0
        %653 = vmatpush2.bf16.msra.mxu0 %v546
        %654 = vmatprep.subr.bf16.mxu0 0
        %655 = vmatpush2.bf16.msra.mxu0 %v545
        %656 = vmatprep.subr.bf16.mxu0 0
        %657 = vmatpush2.bf16.msra.mxu0 %v544
        %658 = vmatprep.subr.bf16.mxu0 0
        %659 = vmatpush2.bf16.msra.mxu0 %v543
        %660 = vmatprep.subr.bf16.mxu0 0
        %661 = vmatpush2.bf16.msra.mxu0 %v542
        %662 = vmatprep.subr.bf16.mxu0 0
        %663 = vmatpush2.bf16.msra.mxu0 %v541
        %664 = vmatprep.subr.bf16.mxu0 0
        %665 = vmatpush2.bf16.msra.mxu0 %v540
        %666 = vmatprep.mubr.bf16.mxu0 %v232
        %667 = vmatmul.mubr.bf16.gmra.mxu0 %v231
        %v668 = vpop.f32.mrf.mxu0
        %v669 = vadd.f32 0.0, %v668
        %v670 = vpop.f32.mrf.mxu0
        %v671 = vpop.f32.mrf.mxu0
        %v672 = vpop.f32.mrf.mxu0
        %673 = vdwg.mxu0
        %674 = vmatprep.subr.bf16.mxu0 0
        %675 = vmatpush1.bf16.msra.mxu0 %v555
        %676 = vmatprep.subr.bf16.mxu0 0
        %677 = vmatpush1.bf16.msra.mxu0 %v554
        %678 = vmatprep.subr.bf16.mxu0 0
        %679 = vmatpush1.bf16.msra.mxu0 %v553
        %680 = vmatprep.subr.bf16.mxu0 0
        %681 = vmatpush1.bf16.msra.mxu0 %v552
        %682 = vmatprep.subr.bf16.mxu0 0
        %683 = vmatpush1.bf16.msra.mxu0 %v551
        %684 = vmatprep.subr.bf16.mxu0 0
        %685 = vmatpush1.bf16.msra.mxu0 %v550
        %686 = vmatprep.subr.bf16.mxu0 0
        %687 = vmatpush1.bf16.msra.mxu0 %v549
        %688 = vmatprep.subr.bf16.mxu0 0
        %689 = vmatpush1.bf16.msra.mxu0 %v548
        %690 = vmatprep.subr.bf16.mxu0 0
        %691 = vmatpush2.bf16.msra.mxu0 %v563
        %692 = vmatprep.subr.bf16.mxu0 0
        %693 = vmatpush2.bf16.msra.mxu0 %v562
        %694 = vmatprep.subr.bf16.mxu0 0
        %695 = vmatpush2.bf16.msra.mxu0 %v561
        %696 = vmatprep.subr.bf16.mxu0 0
        %697 = vmatpush2.bf16.msra.mxu0 %v560
        %698 = vmatprep.subr.bf16.mxu0 0
        %699 = vmatpush2.bf16.msra.mxu0 %v559
        %700 = vmatprep.subr.bf16.mxu0 0
        %701 = vmatpush2.bf16.msra.mxu0 %v558
        %702 = vmatprep.subr.bf16.mxu0 0
        %703 = vmatpush2.bf16.msra.mxu0 %v557
        %704 = vmatprep.subr.bf16.mxu0 0
        %705 = vmatpush2.bf16.msra.mxu0 %v556
        %706 = vmatprep.mubr.bf16.mxu0 %v234
        %707 = vmatmul.mubr.bf16.gmra.mxu0 %v233
        %v708 = vpop.f32.mrf.mxu0
        %v709 = vadd.f32 %v669, %v708
        %v710 = vpop.f32.mrf.mxu0
        %v711 = vpop.f32.mrf.mxu0
        %v712 = vpop.f32.mrf.mxu0
        %713 = vdwg.mxu0
        %714 = vmatprep.subr.bf16.mxu0 0
        %715 = vmatpush1.bf16.msra.mxu0 %v571
        %716 = vmatprep.subr.bf16.mxu0 0
        %717 = vmatpush1.bf16.msra.mxu0 %v570
        %718 = vmatprep.subr.bf16.mxu0 0
        %719 = vmatpush1.bf16.msra.mxu0 %v569
        %720 = vmatprep.subr.bf16.mxu0 0
        %721 = vmatpush1.bf16.msra.mxu0 %v568
        %722 = vmatprep.subr.bf16.mxu0 0
        %723 = vmatpush1.bf16.msra.mxu0 %v567
        %724 = vmatprep.subr.bf16.mxu0 0
        %725 = vmatpush1.bf16.msra.mxu0 %v566
        %726 = vmatprep.subr.bf16.mxu0 0
        %727 = vmatpush1.bf16.msra.mxu0 %v565
        %728 = vmatprep.subr.bf16.mxu0 0
        %729 = vmatpush1.bf16.msra.mxu0 %v564
        %730 = vmatprep.subr.bf16.mxu0 0
        %731 = vmatpush2.bf16.msra.mxu0 %v579
        %732 = vmatprep.subr.bf16.mxu0 0
        %733 = vmatpush2.bf16.msra.mxu0 %v578
        %734 = vmatprep.subr.bf16.mxu0 0
        %735 = vmatpush2.bf16.msra.mxu0 %v577
        %736 = vmatprep.subr.bf16.mxu0 0
        %737 = vmatpush2.bf16.msra.mxu0 %v576
        %738 = vmatprep.subr.bf16.mxu0 0
        %739 = vmatpush2.bf16.msra.mxu0 %v575
        %740 = vmatprep.subr.bf16.mxu0 0
        %741 = vmatpush2.bf16.msra.mxu0 %v574
        %742 = vmatprep.subr.bf16.mxu0 0
        %743 = vmatpush2.bf16.msra.mxu0 %v573
        %744 = vmatprep.subr.bf16.mxu0 0
        %745 = vmatpush2.bf16.msra.mxu0 %v572
        %746 = vmatprep.mubr.bf16.mxu0 %v236
        %747 = vmatmul.mubr.bf16.gmra.mxu0 %v235
        %v748 = vpop.f32.mrf.mxu0
        %v749 = vadd.f32 %v709, %v748
        %v750 = vpop.f32.mrf.mxu0
        %v751 = vpop.f32.mrf.mxu0
        %v752 = vpop.f32.mrf.mxu0
        %753 = vdwg.mxu0
        %754 = vmatprep.subr.bf16.mxu0 0
        %755 = vmatpush1.bf16.msra.mxu0 0
        %756 = vmatprep.subr.bf16.mxu0 0
        %757 = vmatpush1.bf16.msra.mxu0 0
        %758 = vmatprep.subr.bf16.mxu0 0
        %759 = vmatpush1.bf16.msra.mxu0 0
        %760 = vmatprep.subr.bf16.mxu0 0
        %761 = vmatpush1.bf16.msra.mxu0 0
        %762 = vmatprep.subr.bf16.mxu0 0
        %763 = vmatpush1.bf16.msra.mxu0 0
        %764 = vmatprep.subr.bf16.mxu0 0
        %765 = vmatpush1.bf16.msra.mxu0 0
        %766 = vmatprep.subr.bf16.mxu0 0
        %767 = vmatpush1.bf16.msra.mxu0 0
        %768 = vmatprep.subr.bf16.mxu0 0
        %769 = vmatpush1.bf16.msra.mxu0 %v580
        %770 = vmatprep.subr.bf16.mxu0 0
        %771 = vmatpush2.bf16.msra.mxu0 0
        %772 = vmatprep.subr.bf16.mxu0 0
        %773 = vmatpush2.bf16.msra.mxu0 0
        %774 = vmatprep.subr.bf16.mxu0 0
        %775 = vmatpush2.bf16.msra.mxu0 0
        %776 = vmatprep.subr.bf16.mxu0 0
        %777 = vmatpush2.bf16.msra.mxu0 0
        %778 = vmatprep.subr.bf16.mxu0 0
        %779 = vmatpush2.bf16.msra.mxu0 0
        %780 = vmatprep.subr.bf16.mxu0 0
        %781 = vmatpush2.bf16.msra.mxu0 0
        %782 = vmatprep.subr.bf16.mxu0 0
        %783 = vmatpush2.bf16.msra.mxu0 0
        %784 = vmatprep.subr.bf16.mxu0 0
        %785 = vmatpush2.bf16.msra.mxu0 0
        %786 = vmatprep.mubr.bf16.mxu0 0
        %787 = vmatmul.mubr.bf16.gmra.mxu0 %v632
        %v788 = vpop.f32.mrf.mxu0
        %v789 = vadd.f32 %v749, %v788
        %v790 = vpop.f32.mrf.mxu0
        %v791 = vpop.f32.mrf.mxu0
        %v792 = vpop.f32.mrf.mxu0
        %793 = vdwg.mxu0
        %v794 = vmax.f32 %v789, 0.0
        %v795 = vpack.c.bf16 %v794, %v794
        %v796 = vld [vmem:[%s2] sm:$0xf]
        %v797 = vld [vmem:[%s2 + $0x4] sm:$0xf]
        %v798 = vld [vmem:[%s2 + $0x8] sm:$0xf]
        %v799 = vld [vmem:[%s2 + $0xc] sm:$0xf]
        %v800 = vld [vmem:[%s2 + $0x10] sm:$0xf]
        %v801 = vld [vmem:[%s2 + $0x14] sm:$0xf]
        %v802 = vld [vmem:[%s2 + $0x18] sm:$0xf]
        %v803 = vld [vmem:[%s2 + $0x1c] sm:$0xf]
        %v812 = vunpack.c.l.b16 %v796
        %v813 = vunpack.c.l.b16 %v797
        %v814 = vunpack.c.l.b16 %v798
        %v815 = vunpack.c.l.b16 %v799
        %v816 = vunpack.c.l.b16 %v800
        %v817 = vunpack.c.l.b16 %v801
        %v818 = vunpack.c.l.b16 %v802
        %v819 = vunpack.c.l.b16 %v803
        %v820 = vpack.c.b16 %v813, %v812
        %v821 = vpack.c.b16 %v815, %v814
        %v822 = vpack.c.b16 %v817, %v816
        %v823 = vpack.c.b16 %v819, %v818
        %vm828 = vcmask 523264
        %v830 = vsel %vm828, %v795, 0
        %832 = vmatprep.subr.bf16.mxu0 0
        %833 = vmatpush1.bf16.msra.mxu0 0
        %834 = vmatprep.subr.bf16.mxu0 0
        %835 = vmatpush1.bf16.msra.mxu0 0
        %836 = vmatprep.subr.bf16.mxu0 0
        %837 = vmatpush1.bf16.msra.mxu0 0
        %838 = vmatprep.subr.bf16.mxu0 0
        %839 = vmatpush1.bf16.msra.mxu0 0
        %840 = vmatprep.subr.bf16.mxu0 0
        %841 = vmatpush1.bf16.msra.mxu0 %v823
        %842 = vmatprep.subr.bf16.mxu0 0
        %843 = vmatpush1.bf16.msra.mxu0 %v822
        %844 = vmatprep.subr.bf16.mxu0 0
        %845 = vmatpush1.bf16.msra.mxu0 %v821
        %846 = vmatprep.subr.bf16.mxu0 0
        %847 = vmatpush1.bf16.msra.mxu0 %v820
        %848 = vmatprep.subr.bf16.mxu0 0
        %849 = vmatpush2.bf16.msra.mxu0 0
        %850 = vmatprep.subr.bf16.mxu0 0
        %851 = vmatpush2.bf16.msra.mxu0 0
        %852 = vmatprep.subr.bf16.mxu0 0
        %853 = vmatpush2.bf16.msra.mxu0 0
        %854 = vmatprep.subr.bf16.mxu0 0
        %855 = vmatpush2.bf16.msra.mxu0 0
        %856 = vmatprep.subr.bf16.mxu0 0
        %857 = vmatpush2.bf16.msra.mxu0 0
        %858 = vmatprep.subr.bf16.mxu0 0
        %859 = vmatpush2.bf16.msra.mxu0 0
        %860 = vmatprep.subr.bf16.mxu0 0
        %861 = vmatpush2.bf16.msra.mxu0 0
        %862 = vmatprep.subr.bf16.mxu0 0
        %863 = vmatpush2.bf16.msra.mxu0 0
        %864 = vmatprep.mubr.bf16.mxu0 0
        %865 = vmatmul.mubr.bf16.gmra.mxu0 %v830
        %v866 = vpop.f32.mrf.mxu0
        %v867 = vadd.f32 0.0, %v866
        %v868 = vpop.f32.mrf.mxu0
        %v869 = vpop.f32.mrf.mxu0
        %v870 = vpop.f32.mrf.mxu0
        %871 = vdwg.mxu0
        %v872 = vmax.f32 %v867, 0.0
        %v873 = vpack.c.bf16 %v872, %v872
        %v874 = vld [vmem:[%s3] sm:$0xf]
        %v875 = vld [vmem:[%s3 + $0x4] sm:$0xf]
        %v876 = vld [vmem:[%s3 + $0x8] sm:$0xf]
        %v877 = vld [vmem:[%s3 + $0xc] sm:$0xf]
        %v878 = vld [vmem:[%s3 + $0x10] sm:$0xf]
        %v879 = vld [vmem:[%s3 + $0x14] sm:$0xf]
        %v880 = vld [vmem:[%s3 + $0x18] sm:$0xf]
        %v881 = vld [vmem:[%s3 + $0x1c] sm:$0xf]
        %v890 = vunpack.c.l.b16 %v874
        %v891 = vunpack.c.l.b16 %v875
        %v892 = vunpack.c.l.b16 %v876
        %v893 = vunpack.c.l.b16 %v877
        %v894 = vunpack.c.l.b16 %v878
        %v895 = vunpack.c.l.b16 %v879
        %v896 = vunpack.c.l.b16 %v880
        %v897 = vunpack.c.l.b16 %v881
        %v898 = vpack.c.b16 %v891, %v890
        %v899 = vpack.c.b16 %v893, %v892
        %v900 = vpack.c.b16 %v895, %v894
        %v901 = vpack.c.b16 %v897, %v896
        %v907 = vsel %vm828, %v873, 0
        %909 = vmatprep.subr.bf16.mxu0 0
        %910 = vmatpush1.bf16.msra.mxu0 0
        %911 = vmatprep.subr.bf16.mxu0 0
        %912 = vmatpush1.bf16.msra.mxu0 0
        %913 = vmatprep.subr.bf16.mxu0 0
        %914 = vmatpush1.bf16.msra.mxu0 0
        %915 = vmatprep.subr.bf16.mxu0 0
        %916 = vmatpush1.bf16.msra.mxu0 0
        %917 = vmatprep.subr.bf16.mxu0 0
        %918 = vmatpush1.bf16.msra.mxu0 %v901
        %919 = vmatprep.subr.bf16.mxu0 0
        %920 = vmatpush1.bf16.msra.mxu0 %v900
        %921 = vmatprep.subr.bf16.mxu0 0
        %922 = vmatpush1.bf16.msra.mxu0 %v899
        %923 = vmatprep.subr.bf16.mxu0 0
        %924 = vmatpush1.bf16.msra.mxu0 %v898
        %925 = vmatprep.subr.bf16.mxu0 0
        %926 = vmatpush2.bf16.msra.mxu0 0
        %927 = vmatprep.subr.bf16.mxu0 0
        %928 = vmatpush2.bf16.msra.mxu0 0
        %929 = vmatprep.subr.bf16.mxu0 0
        %930 = vmatpush2.bf16.msra.mxu0 0
        %931 = vmatprep.subr.bf16.mxu0 0
        %932 = vmatpush2.bf16.msra.mxu0 0
        %933 = vmatprep.subr.bf16.mxu0 0
        %934 = vmatpush2.bf16.msra.mxu0 0
        %935 = vmatprep.subr.bf16.mxu0 0
        %936 = vmatpush2.bf16.msra.mxu0 0
        %937 = vmatprep.subr.bf16.mxu0 0
        %938 = vmatpush2.bf16.msra.mxu0 0
        %939 = vmatprep.subr.bf16.mxu0 0
        %940 = vmatpush2.bf16.msra.mxu0 0
        %941 = vmatprep.mubr.bf16.mxu0 0
        %942 = vmatmul.mubr.bf16.gmra.mxu0 %v907
        %v943 = vpop.f32.mrf.mxu0
        %v944 = vadd.f32 0.0, %v943
        %v945 = vpop.f32.mrf.mxu0
        %v946 = vpop.f32.mrf.mxu0
        %v947 = vpop.f32.mrf.mxu0
        %948 = vdwg.mxu0
        %v949 = vmax.f32 %v944, 0.0
        %v950 = vpack.c.bf16 %v949, %v949
        %v951 = vld [vmem:[%s4] sm:$0xf]
        %v952 = vld [vmem:[%s4 + $0x4] sm:$0xf]
        %v953 = vld [vmem:[%s4 + $0x8] sm:$0xf]
        %v954 = vld [vmem:[%s4 + $0xc] sm:$0xf]
        %v955 = vld [vmem:[%s4 + $0x10] sm:$0xf]
        %v956 = vld [vmem:[%s4 + $0x14] sm:$0xf]
        %v957 = vld [vmem:[%s4 + $0x18] sm:$0xf]
        %v958 = vld [vmem:[%s4 + $0x1c] sm:$0xf]
        %v967 = vunpack.c.l.b16 %v951
        %v968 = vunpack.c.l.b16 %v952
        %v969 = vunpack.c.l.b16 %v953
        %v970 = vunpack.c.l.b16 %v954
        %v971 = vunpack.c.l.b16 %v955
        %v972 = vunpack.c.l.b16 %v956
        %v973 = vunpack.c.l.b16 %v957
        %v974 = vunpack.c.l.b16 %v958
        %v975 = vpack.c.b16 %v968, %v967
        %v976 = vpack.c.b16 %v970, %v969
        %v977 = vpack.c.b16 %v972, %v971
        %v978 = vpack.c.b16 %v974, %v973
        %v984 = vsel %vm828, %v950, 0
        %986 = vmatprep.subr.bf16.mxu0 0
        %987 = vmatpush1.bf16.msra.mxu0 0
        %988 = vmatprep.subr.bf16.mxu0 0
        %989 = vmatpush1.bf16.msra.mxu0 0
        %990 = vmatprep.subr.bf16.mxu0 0
        %991 = vmatpush1.bf16.msra.mxu0 0
        %992 = vmatprep.subr.bf16.mxu0 0
        %993 = vmatpush1.bf16.msra.mxu0 0
        %994 = vmatprep.subr.bf16.mxu0 0
        %995 = vmatpush1.bf16.msra.mxu0 %v978
        %996 = vmatprep.subr.bf16.mxu0 0
        %997 = vmatpush1.bf16.msra.mxu0 %v977
        %998 = vmatprep.subr.bf16.mxu0 0
        %999 = vmatpush1.bf16.msra.mxu0 %v976
        %1000 = vmatprep.subr.bf16.mxu0 0
        %1001 = vmatpush1.bf16.msra.mxu0 %v975
        %1002 = vmatprep.subr.bf16.mxu0 0
        %1003 = vmatpush2.bf16.msra.mxu0 0
        %1004 = vmatprep.subr.bf16.mxu0 0
        %1005 = vmatpush2.bf16.msra.mxu0 0
        %1006 = vmatprep.subr.bf16.mxu0 0
        %1007 = vmatpush2.bf16.msra.mxu0 0
        %1008 = vmatprep.subr.bf16.mxu0 0
        %1009 = vmatpush2.bf16.msra.mxu0 0
        %1010 = vmatprep.subr.bf16.mxu0 0
        %1011 = vmatpush2.bf16.msra.mxu0 0
        %1012 = vmatprep.subr.bf16.mxu0 0
        %1013 = vmatpush2.bf16.msra.mxu0 0
        %1014 = vmatprep.subr.bf16.mxu0 0
        %1015 = vmatpush2.bf16.msra.mxu0 0
        %1016 = vmatprep.subr.bf16.mxu0 0
        %1017 = vmatpush2.bf16.msra.mxu0 0
        %1018 = vmatprep.mubr.bf16.mxu0 0
        %1019 = vmatmul.mubr.bf16.gmra.mxu0 %v984
        %v1020 = vpop.f32.mrf.mxu0
        %v1021 = vadd.f32 0.0, %v1020
        %v1022 = vpop.f32.mrf.mxu0
        %v1023 = vpop.f32.mrf.mxu0
        %v1024 = vpop.f32.mrf.mxu0
        %1025 = vdwg.mxu0
        %vm1026 = vcmask 80896
        %1027 = vst.msk [vmem:[%s217] sm:$0xff] %vm1026, %v1021
        %s1028 = sand.u32 %s137, 1
        %s1029 = scalar_lea.sflag [#allocation3], %s1028
        %s1030 = sand.u32 %s137, 1
        %s1031 = smul.addr %s1030, 8
        %s1032 = scalar_lea.vmem [#allocation2], %s1031
        // Predicated region
        $region41: #{mlp_forward.1} parent=39 // pred_check
          %p1033 = pneg %p147
        $region42: #{mlp_forward.1} parent=39 // pred_check_branch
          %1035 = sbr.rel (%p1033) target = $region44
        $region43: #{mlp_forward.1} parent=39 // pred_region
          %s1037 = ssub.s32 128, 128
          %1038 = vsyncadd %s1029, %s1037
          %s1039 = smul.addr %s19, 128
          %s1040 = scalar_lea.hbm %s5, %s1039
          %s1042 = sshll.u32 %s1032, 4
          %s1043 = int_to_ptr.vmem [resolvable:$true] %s1042
          %1045 = dma.vmem_to_hbm [thread:$0]  %s1043, 128, %s1040, %s1029
        $region44: #{mlp_forward.1} parent=39 // pred_fallthru
          _
      $region40: #{mlp_forward.1} parent=5 // pred_fallthru
        _
      %p1046 = scmp.le.s32.totalorder 2, %s14
      // Predicated region
      $region45: #{mlp_forward.1} parent=5 // pred_check
        %p1047 = pneg %p1046
      $region46: #{mlp_forward.1} parent=5 // pred_check_branch
        %1049 = sbr.rel (%p1047) target = $region48
      $region47: #{mlp_forward.1} parent=5 // pred_region
        %s1050 = ssub.s32 %s14, 2
        // Predicated region
        $region49: #{mlp_forward.1} parent=47 // pred_check
          %p1051 = pneg %p153
        $region50: #{mlp_forward.1} parent=47 // pred_check_branch
          %1053 = sbr.rel (%p1051) target = $region52
        $region51: #{mlp_forward.1} parent=47 // pred_region
          %s1054 = sand.u32 %s138, 1
          %s1055 = scalar_lea.sflag [#allocation3], %s1054
          %s1056 = sand.u32 %s138, 1
          %s1057 = smul.addr %s1056, 8
          %s1058 = scalar_lea.vmem [#allocation2], %s1057
          %1059 = dma.done %s1055, 128
        $region52: #{mlp_forward.1} parent=47 // pred_fallthru
          _
      $region48: #{mlp_forward.1} parent=5 // pred_fallthru
        _
    $region6: #{mlp_forward.1} parent=1 // loop_footer
      %s18 = sadd.s32 1, %s14
    $region7: #{mlp_forward.1} parent=1 // loop_footer_branch
      %13 = sbr.rel target = $region3
    $region8: #{mlp_forward.1} parent=1 // loop_exit
      _
    %1060 = vsyncpa [#allocation3], 1
    %s1061 = scalar_lea.sflag [#allocation3], 1
    %1062 = vsyncpa %s1061, 1

</llo_original>
